<compile_context>
chip_gen: v7x
topology: tpu7x:2x2x1
jax: 0.10.0
libtpu: 0.0.40
codegen_flags: <defaults>
</compile_context>

<pallas_src>
from functools import partial

import jax
import jax.numpy as jnp
import numpy as np
from jax import lax
from jax.experimental import pallas as pl
from jax.experimental.pallas import tpu as pltpu

# ----- module hyper-parameters (from __init__ defaults) ----------------------
ALPHA = 0.25
GAMMA = 2.0                 # exploited as an exact square in the kernel
FG_WEIGHT = 13.0
BG_WEIGHT = 1.0
DOWNSAMPLE_FACTOR = 1
DEPTH_MIN = 0.001
DEPTH_MAX = 60.0
NUM_DEPTH_BINS = 80
EPS_SOFTMAX = 1e-8          # kornia focal_loss eps (kept only in p for (1-p)^2)
EPS_ONEHOT = 1e-6           # kornia one_hot eps

MAX_TILE_LANES = 4096       # pixel-tile cap; ~19 MB total VMEM at T=4096
VMEM_LIMIT_BYTES = 48 * 1024 * 1024   # > v5e 16-MiB default, < v7x 64-MiB phys


# ----- deterministic "parameter": depth_bin_values ---------------------------
def make_depth_bin_values():
    bin_size = 2.0 * (DEPTH_MAX - DEPTH_MIN) / (NUM_DEPTH_BINS * (1 + NUM_DEPTH_BINS))
    bin_indice = jnp.linspace(0.0, NUM_DEPTH_BINS - 1, NUM_DEPTH_BINS)
    bin_value = (bin_indice + 0.5) ** 2 * bin_size / 2.0 - bin_size / 8.0 + DEPTH_MIN
    return jnp.concatenate([bin_value, jnp.array([DEPTH_MAX], dtype=bin_value.dtype)], axis=0)


# ----- Pallas kernel ----------------------------------------------------------
# Refs (leading batch / parallel-split dims squeezed away by the BlockSpecs):
#   logits_ref, resid_ref : (C, T)   native dtype (f32 or bf16)
#   aux_ref               : (3, T)   f32  rows = [target bin, residual target,
#                                                 alpha * pixel_weight (0 on pad)]
# Outputs (resident accumulators, one per (batch, pixel-half)):
#   map_out_ref, res_out_ref : (1, 1) f32 partial sums
def _ddn_loss_kernel(logits_ref, resid_ref, aux_ref, map_out_ref, res_out_ref):
    t = pl.program_id(2)

    @pl.when(t == 0)
    def _init():
        map_out_ref[...] = jnp.zeros_like(map_out_ref)
        res_out_ref[...] = jnp.zeros_like(res_out_ref)

    logits = logits_ref[...].astype(jnp.float32)   # (C, T)
    resid = resid_ref[...].astype(jnp.float32)     # (C, T)
    tgt = aux_ref[0:1, :].astype(jnp.int32)        # (1, T) target bin index
    rtgt = aux_ref[1:2, :]                         # (1, T) residual target
    wsc = aux_ref[2:3, :]                          # (1, T) alpha * pixel weight

    C, T = logits.shape

    # softmax statistics over the depth-bin (sublane) axis
    m = jnp.max(logits, axis=0, keepdims=True)              # (1, T)
    e = jnp.exp(logits - m)                                  # (C, T)  EUP
    sum_e = jnp.sum(e, axis=0, keepdims=True)                # (1, T)
    inv_sum = pl.reciprocal(sum_e, approx=True)              # (1, T)  EUP vrcp
    log_sum = jnp.log(sum_e)                                 # (1, T)  EUP (T logs, not C*T)

    p = e * inv_sum + EPS_SOFTMAX                            # (C, T)
    one_m_p = 1.0 - p
    w = one_m_p * one_m_p                                    # (1-p)^2, exact (gamma==2)

    # one-hot of the target bin (+ kornia eps), fused with focal weight
    iota = lax.broadcasted_iota(jnp.int32, (C, T), 0)
    one_hot = jnp.where(iota == tgt, 1.0 + EPS_ONEHOT, EPS_ONEHOT)
    ohw = one_hot * w                                        # reused by both branches

    # -log softmax (per bin, but only T logs above)
    neglogp = (m + log_sum) - logits                         # (C, T)
    diff = jnp.abs(resid - rtgt)                             # (C, T)

    map_pix = jnp.sum(ohw * neglogp, axis=0, keepdims=True)  # (1, T)
    res_pix = jnp.sum(ohw * diff, axis=0, keepdims=True)     # (1, T)

    # alpha and fg/bg balancing already folded into wsc (0 on padded lanes)
    map_out_ref[...] += jnp.sum(map_pix * wsc, axis=1, keepdims=True)
    res_out_ref[...] += jnp.sum(res_pix * wsc, axis=1, keepdims=True)


# ----- tiling plan ------------------------------------------------------------
def _round_up(x, m):
    return ((x + m - 1) // m) * m


def _plan_tiles(hw, max_tile=MAX_TILE_LANES, tile_hw=None):
    """Pick pixel tile T (multiple of 128) and the lane-padded pixel count."""
    if tile_hw is not None:
        T = int(tile_hw)
        assert T % 128 == 0, "tile_hw must be a multiple of 128"
        return T, _round_up(hw, T)
    hw128 = _round_up(hw, 128)
    if hw128 <= max_tile:
        return hw128, hw128
    # largest multiple of 128 <= max_tile that divides the 128-padded extent
    best = 128
    t = 256
    while t <= max_tile:
        if hw128 % t == 0:
            best = t
        t += 128
    if best >= 1024:
        return best, hw128
    # no large divisor: pad further so tiles stay big and lane-dense
    return max_tile, _round_up(hw, max_tile)


def _run_loss_kernel(logits_cs, resid_cs, aux, tile_lanes):
    B, C, HWp = logits_cs.shape
    T = int(tile_lanes)
    assert HWp % T == 0
    nt = HWp // T
    # Split pixel tiles into 2 parallel halves when possible so v7x's two
    # TensorCores both get work even at B=1 (no-op cost on v5e/v6e).
    P = 2 if (nt >= 2 and nt % 2 == 0) else 1
    ntp = nt // P

    big_map = lambda b, p, t: (b, 0, p * ntp + t)
    out_map = lambda b, p, t: (b, p, 0, 0)

    in_bytes = (logits_cs.size * logits_cs.dtype.itemsize
                + resid_cs.size * resid_cs.dtype.itemsize
                + aux.size * aux.dtype.itemsize)
    ce = pl.CostEstimate(
        flops=int(16 * B * C * HWp),
        transcendentals=int(B * HWp * (C + 2)),
        bytes_accessed=int(in_bytes + 2 * B * P * 4),
    )

    return pl.pallas_call(
        _ddn_loss_kernel,
        out_shape=(jax.ShapeDtypeStruct((B, P, 1, 1), jnp.float32),
                   jax.ShapeDtypeStruct((B, P, 1, 1), jnp.float32)),
        grid_spec=pltpu.PrefetchScalarGridSpec(
            num_scalar_prefetch=0,
            grid=(B, P, ntp),
            in_specs=[
                pl.BlockSpec((None, C, T), big_map),
                pl.BlockSpec((None, C, T), big_map),
                pl.BlockSpec((None, 3, T), big_map),
            ],
            out_specs=[
                pl.BlockSpec((None, None, 1, 1), out_map),
                pl.BlockSpec((None, None, 1, 1), out_map),
            ],
        ),
        compiler_params=pltpu.CompilerParams(
            dimension_semantics=("parallel", "parallel", "arbitrary"),
            vmem_limit_bytes=VMEM_LIMIT_BYTES),
        cost_estimate=ce,
    )(logits_cs, resid_cs, aux)


# ----- plain-JAX glue ---------------------------------------------------------
def _int_boxes(gt_boxes2d):
    # floor(x1, y1), ceil(x2, y2) -> int (mirrors in-place mutation in torch code)
    return jnp.concatenate(
        [jnp.floor(gt_boxes2d[:, :2]), jnp.ceil(gt_boxes2d[:, 2:])], axis=1
    ).astype(jnp.int32)


def _build_depth_map_and_fg(boxes_int, gt_center_depth, num_gt_per_img, B, H, W):
    """Target-depth painting + fg mask without a (B,N,H,W) selector.

    Painting boxes in descending-depth order (nearest last) equals taking the
    per-pixel minimum depth over covering boxes; background stays DEPTH_MAX.
    Implemented as a scan over boxes carrying the running min / fg mask.
    """
    N = int(sum(num_gt_per_img))
    if N == 0:
        return (jnp.full((B, H, W), DEPTH_MAX, dtype=jnp.float32),
                jnp.zeros((B, H, W), dtype=bool))

    rows = jnp.arange(H, dtype=jnp.int32)[:, None]          # (H, 1)
    cols = jnp.arange(W, dtype=jnp.int32)[None, :]          # (1, W)
    batch_of = jnp.arange(B, dtype=jnp.int32)[:, None, None]  # (B, 1, 1)
    batch_id = jnp.asarray(
        np.repeat(np.arange(B), np.asarray(num_gt_per_img)), dtype=jnp.int32)  # (N,)

    def step(carry, x):
        mindep, fg = carry
        box, depth, bidx = x
        in_box = ((rows >= box[1]) & (rows < box[3]) &
                  (cols >= box[0]) & (cols < box[2]))        # (H, W)
        sel = (batch_of == bidx) & in_box[None]              # (B, H, W)
        mindep = jnp.where(sel, jnp.minimum(mindep, depth), mindep)
        fg = fg | sel
        return (mindep, fg), None

    init = (jnp.full((B, H, W), jnp.inf, dtype=jnp.float32),
            jnp.zeros((B, H, W), dtype=bool))
    (mindep, fg), _ = lax.scan(
        step, init, (boxes_int, gt_center_depth.astype(jnp.float32), batch_id))
    depth_map = jnp.where(fg, mindep, jnp.float32(DEPTH_MAX)).astype(jnp.float32)
    return depth_map, fg


def _bin_depths_lid_target(depth_map):
    bin_size = 2.0 * (DEPTH_MAX - DEPTH_MIN) / (NUM_DEPTH_BINS * (1 + NUM_DEPTH_BINS))
    indices = -0.5 + 0.5 * jnp.sqrt(1.0 + 8.0 * (depth_map - DEPTH_MIN) / bin_size)
    bad = (indices < 0) | (indices > NUM_DEPTH_BINS) | ~jnp.isfinite(indices)
    indices = jnp.where(bad, float(NUM_DEPTH_BINS), indices)
    return indices.astype(jnp.int32)


@partial(jax.jit, static_argnames=("num_gt_per_img", "tile_hw"))
def ddn_with_residual_loss(depth_logits, depth_residuals, gt_boxes2d,
                           num_gt_per_img, gt_center_depth, tile_hw=None):
    """Returns (depth_map_loss, depth_residual_loss) scalars."""
    B, C, H, W = depth_logits.shape
    assert C == NUM_DEPTH_BINS + 1
    HW = H * W
    T, HWp = _plan_tiles(HW, MAX_TILE_LANES, tile_hw)

    depth_bin_values = make_depth_bin_values()
    boxes_int = _int_boxes(gt_boxes2d)
    depth_map_values, fg_mask = _build_depth_map_and_fg(
        boxes_int, gt_center_depth, num_gt_per_img, B, H, W)            # (B, H, W)
    depth_target = _bin_depths_lid_target(depth_map_values)             # (B, H, W) int32
    weighted_depth = depth_bin_values[depth_target]                     # (B, H, W)
    depth_residual_target = (depth_map_values - weighted_depth).astype(jnp.float32)

    # Packed aux stream: one (B,3,HW) array instead of three (B,1,HW) streams.
    # Row 2 pre-folds alpha and the Balancer fg/bg weighting.
    wsc = jnp.where(fg_mask, FG_WEIGHT, BG_WEIGHT).astype(jnp.float32) * ALPHA
    aux = jnp.stack([depth_target.reshape(B, HW).astype(jnp.float32),
                     depth_residual_target.reshape(B, HW),
                     wsc.reshape(B, HW)], axis=1)                        # (B, 3, HW)

    # Native NCHW -> (B, C, HW): pure reshape, keep the model's dtype (bf16 ok).
    logits_cs = depth_logits.reshape(B, C, HW)
    resid_cs = depth_residuals.reshape(B, C, HW)

    pad = HWp - HW
    if pad:
        # lane padding: pixel weight row pads with 0, so padded lanes add nothing
        logits_cs = jnp.pad(logits_cs, ((0, 0), (0, 0), (0, pad)))
        resid_cs = jnp.pad(resid_cs, ((0, 0), (0, 0), (0, pad)))
        aux = jnp.pad(aux, ((0, 0), (0, 0), (0, pad)))

    map_part, res_part = _run_loss_kernel(logits_cs, resid_cs, aux, T)

    # Balancer final normalization: weighted sum / num_pixels (real pixels only)
    num_pixels = jnp.float32(B * H * W)
    depth_map_loss = jnp.sum(map_part) / num_pixels
    depth_residual_loss = jnp.sum(res_part) / num_pixels
    return depth_map_loss, depth_residual_loss


# ----- pure-JAX reference (correctness check only) ----------------------------
def _build_depth_map_and_fg_dense(boxes_int, gt_center_depth, num_gt_per_img, B, H, W):
    """Broadcast (B,N,H,W) builder — independent cross-check of the scan version."""
    N = int(sum(num_gt_per_img))
    if N == 0:
        return (jnp.full((B, H, W), DEPTH_MAX, dtype=jnp.float32),
                jnp.zeros((B, H, W), dtype=bool))
    rows = jnp.arange(H, dtype=jnp.int32)[None, :, None]
    cols = jnp.arange(W, dtype=jnp.int32)[None, None, :]
    u1 = boxes_int[:, 0][:, None, None]; v1 = boxes_int[:, 1][:, None, None]
    u2 = boxes_int[:, 2][:, None, None]; v2 = boxes_int[:, 3][:, None, None]
    in_box = (rows >= v1) & (rows < v2) & (cols >= u1) & (cols < u2)      # (N,H,W)
    batch_id = np.repeat(np.arange(B), np.asarray(num_gt_per_img))
    batch_oh = jnp.asarray(batch_id)[None, :] == jnp.arange(B)[:, None]    # (B,N)
    sel = batch_oh[:, :, None, None] & in_box[None]
    fg = jnp.any(sel, axis=1)
    depth_bc = gt_center_depth.astype(jnp.float32)[None, :, None, None]
    nearest = jnp.min(jnp.where(sel, depth_bc, jnp.inf), axis=1)
    depth_map = jnp.where(fg, nearest, jnp.float32(DEPTH_MAX)).astype(jnp.float32)
    return depth_map, fg


def _reference_losses(depth_logits, depth_residuals, gt_boxes2d,
                      num_gt_per_img, gt_center_depth):
    B, C, H, W = depth_logits.shape
    depth_bin_values = make_depth_bin_values()
    boxes_int = _int_boxes(gt_boxes2d)
    depth_map_values, fg_mask = _build_depth_map_and_fg_dense(
        boxes_int, gt_center_depth, num_gt_per_img, B, H, W)
    depth_target = _bin_depths_lid_target(depth_map_values)
    weighted_depth = depth_bin_values[depth_target]
    rtgt = depth_map_values - weighted_depth

    logits = jnp.transpose(depth_logits, (0, 2, 3, 1)).astype(jnp.float32)  # (B,H,W,C)
    resid = jnp.transpose(depth_residuals, (0, 2, 3, 1)).astype(jnp.float32)

    p = jax.nn.softmax(logits, axis=-1) + EPS_SOFTMAX
    w = (1.0 - p) ** 2
    focal_cls = -ALPHA * w * jnp.log(p)
    one_hot = jax.nn.one_hot(depth_target, C, dtype=jnp.float32) + EPS_ONEHOT
    loss_map = jnp.sum(one_hot * focal_cls, axis=-1)

    diff = jnp.abs(resid - rtgt[..., None])
    loss_res = jnp.sum(one_hot * (ALPHA * w * diff), axis=-1)

    weights = jnp.where(fg_mask, FG_WEIGHT, BG_WEIGHT).astype(jnp.float32)
    num_pixels = jnp.float32(B * H * W)
    return (jnp.sum(loss_map * weights) / num_pixels,
            jnp.sum(loss_res * weights) / num_pixels)


if __name__ == "__main__":
    key = jax.random.PRNGKey(0)
    k1, k2, k3, k4, k5 = jax.random.split(key, 5)

    B, H, W = 2, 32, 32
    C = NUM_DEPTH_BINS + 1  # 81

    depth_logits = jax.random.normal(k1, (B, C, H, W), dtype=jnp.float32)
    depth_residuals = 0.5 * jax.random.normal(k2, (B, C, H, W), dtype=jnp.float32)

    num_gt_per_img = (2, 3)
    N = sum(num_gt_per_img)
    xy1 = jax.random.uniform(k3, (N, 2), minval=0.0, maxval=16.0)
    wh = jax.random.uniform(k4, (N, 2), minval=2.0, maxval=12.0)
    gt_boxes2d = jnp.concatenate([xy1, xy1 + wh], axis=1)               # (N, 4)
    gt_center_depth = jax.random.uniform(k5, (N,), minval=1.0, maxval=55.0)

    # Case 1: tile_hw=128 forces 8 pixel-tiles/image -> exercises the multi-tile
    # accumulation path and the 2-way parallel pixel split (grid = (2, 2, 4)).
    dm_loss, dr_loss = ddn_with_residual_loss(
        depth_logits, depth_residuals, gt_boxes2d, num_gt_per_img,
        gt_center_depth, tile_hw=128)
    jax.block_until_ready((dm_loss, dr_loss))
    ref_dm, ref_dr = _reference_losses(
        depth_logits, depth_residuals, gt_boxes2d, num_gt_per_img, gt_center_depth)
    assert jnp.isfinite(dm_loss) and jnp.isfinite(dr_loss)
    assert jnp.allclose(dm_loss, ref_dm, rtol=2e-3, atol=1e-5)
    assert jnp.allclose(dr_loss, ref_dr, rtol=2e-3, atol=1e-5)

    # Case 2: HW = 900 (not a multiple of 128) -> exercises the lane-padding
    # path (padded lanes carry weight 0) with the default tile planner.
    H2, W2 = 30, 30
    dl2 = depth_logits[:, :, :H2, :W2]
    drs2 = depth_residuals[:, :, :H2, :W2]
    dm2, drl2 = ddn_with_residual_loss(
        dl2, drs2, gt_boxes2d, num_gt_per_img, gt_center_depth)
    jax.block_until_ready((dm2, drl2))
    ref_dm2, ref_dr2 = _reference_losses(
        dl2, drs2, gt_boxes2d, num_gt_per_img, gt_center_depth)
    assert jnp.isfinite(dm2) and jnp.isfinite(drl2)
    assert jnp.allclose(dm2, ref_dm2, rtol=2e-3, atol=1e-5)
    assert jnp.allclose(drl2, ref_dr2, rtol=2e-3, atol=1e-5)

    print("KERNEL_OK")
</pallas_src>

<mosaic_0001>
module attributes {stable_mosaic.version = 11 : i64} {
  func.func @_ddn_loss_kernel(%arg0: i32, %arg1: i32, %arg2: i32, %arg3: memref<1x81x128xf32, #tpu.memory_space<vmem>>, %arg4: memref<1x81x128xf32, #tpu.memory_space<vmem>>, %arg5: memref<1x3x128xf32, #tpu.memory_space<vmem>>, %arg6: memref<1x1x1x1xf32, #tpu.memory_space<vmem>>, %arg7: memref<1x1x1x1xf32, #tpu.memory_space<vmem>>) attributes {dimension_semantics = [#tpu.dimension_semantics<parallel>, #tpu.dimension_semantics<parallel>, #tpu.dimension_semantics<arbitrary>], iteration_bounds = array<i64: 2, 2, 4>, scalar_prefetch = 0 : i64, scratch_operands = 0 : i64, tpu.core_type = #tpu.core_type<tc>, window_params = [{transform_indices = @transform_0, window_bounds = array<i64: 1, 81, 128>}, {transform_indices = @transform_1, window_bounds = array<i64: 1, 81, 128>}, {transform_indices = @transform_2, window_bounds = array<i64: 1, 3, 128>}, {transform_indices = @transform_3, window_bounds = array<i64: 1, 1, 1, 1>}, {transform_indices = @transform_4, window_bounds = array<i64: 1, 1, 1, 1>}]} {
    %c0_i32 = arith.constant 0 : i32
    %0 = arith.cmpi eq, %arg2, %c0_i32 : i32
    %1 = arith.extui %0 : i1 to i32
    %c0_i32_0 = arith.constant 0 : i32
    %2 = arith.cmpi ne, %1, %c0_i32_0 : i32
    scf.if %2 {
      %cst_38 = arith.constant 0.000000e+00 : f32
      %67 = vector.broadcast %cst_38 : f32 to vector<1x1xf32>
      %c0_39 = arith.constant 0 : index
      %c0_40 = arith.constant 0 : index
      %c0_41 = arith.constant 0 : index
      %c0_42 = arith.constant 0 : index
      %68 = vector.load %arg6[%c0_39, %c0_40, %c0_41, %c0_42] : memref<1x1x1x1xf32, #tpu.memory_space<vmem>>, vector<1x1x1x1xf32>
      %69 = vector.shape_cast %68 : vector<1x1x1x1xf32> to vector<1x1xf32>
      %70 = vector.shape_cast %67 : vector<1x1xf32> to vector<1x1x1x1xf32>
      tpu.vector_store %arg6[%c0_39, %c0_40, %c0_41, %c0_42], %70 {strides = array<i32>} : memref<1x1x1x1xf32, #tpu.memory_space<vmem>>, vector<1x1x1x1xf32>,
      %cst_43 = arith.constant 0.000000e+00 : f32
      %71 = vector.broadcast %cst_43 : f32 to vector<1x1xf32>
      %c0_44 = arith.constant 0 : index
      %c0_45 = arith.constant 0 : index
      %c0_46 = arith.constant 0 : index
      %c0_47 = arith.constant 0 : index
      %72 = vector.load %arg7[%c0_44, %c0_45, %c0_46, %c0_47] : memref<1x1x1x1xf32, #tpu.memory_space<vmem>>, vector<1x1x1x1xf32>
      %73 = vector.shape_cast %72 : vector<1x1x1x1xf32> to vector<1x1xf32>
      %74 = vector.shape_cast %71 : vector<1x1xf32> to vector<1x1x1x1xf32>
      tpu.vector_store %arg7[%c0_44, %c0_45, %c0_46, %c0_47], %74 {strides = array<i32>} : memref<1x1x1x1xf32, #tpu.memory_space<vmem>>, vector<1x1x1x1xf32>,
    } else {
    }
    %c0 = arith.constant 0 : index
    %c0_1 = arith.constant 0 : index
    %c0_2 = arith.constant 0 : index
    %3 = vector.load %arg3[%c0, %c0_1, %c0_2] : memref<1x81x128xf32, #tpu.memory_space<vmem>>, vector<1x81x128xf32>
    %4 = vector.shape_cast %3 : vector<1x81x128xf32> to vector<81x128xf32>
    %c0_3 = arith.constant 0 : index
    %c0_4 = arith.constant 0 : index
    %c0_5 = arith.constant 0 : index
    %5 = vector.load %arg4[%c0_3, %c0_4, %c0_5] : memref<1x81x128xf32, #tpu.memory_space<vmem>>, vector<1x81x128xf32>
    %6 = vector.shape_cast %5 : vector<1x81x128xf32> to vector<81x128xf32>
    %c0_6 = arith.constant 0 : index
    %c0_7 = arith.constant 0 : index
    %c0_8 = arith.constant 0 : index
    %7 = vector.load %arg5[%c0_6, %c0_7, %c0_8] : memref<1x3x128xf32, #tpu.memory_space<vmem>>, vector<1x1x128xf32>
    %8 = vector.shape_cast %7 : vector<1x1x128xf32> to vector<1x128xf32>
    %9 = arith.fptosi %8 : vector<1x128xf32> to vector<1x128xi32>
    %c0_9 = arith.constant 0 : index
    %c1 = arith.constant 1 : index
    %c0_10 = arith.constant 0 : index
    %10 = vector.load %arg5[%c0_9, %c1, %c0_10] : memref<1x3x128xf32, #tpu.memory_space<vmem>>, vector<1x1x128xf32>
    %11 = vector.shape_cast %10 : vector<1x1x128xf32> to vector<1x128xf32>
    %c0_11 = arith.constant 0 : index
    %c2 = arith.constant 2 : index
    %c0_12 = arith.constant 0 : index
    %12 = vector.load %arg5[%c0_11, %c2, %c0_12] : memref<1x3x128xf32, #tpu.memory_space<vmem>>, vector<1x1x128xf32>
    %13 = vector.shape_cast %12 : vector<1x1x128xf32> to vector<1x128xf32>
    %cst = arith.constant dense<0xFF800000> : vector<128xf32>
    %14 = vector.multi_reduction <maximumf>, %4, %cst [0] : vector<81x128xf32> to vector<128xf32>
    %15 = vector.shape_cast %14 : vector<128xf32> to vector<1x128xf32>
    %16 = vector.broadcast %15 : vector<1x128xf32> to vector<81x128xf32>
    %17 = arith.subf %4, %16 : vector<81x128xf32>
    %18 = math.exp %17 : vector<81x128xf32>
    %cst_13 = arith.constant dense<0.000000e+00> : vector<128xf32>
    %19 = vector.multi_reduction <add>, %18, %cst_13 [0] : vector<81x128xf32> to vector<128xf32>
    %20 = vector.shape_cast %19 : vector<128xf32> to vector<1x128xf32>
    %21 = tpu.reciprocal %20 {approx = true} : vector<1x128xf32> -> vector<1x128xf32>
    %22 = math.log %20 : vector<1x128xf32>
    %23 = vector.broadcast %21 : vector<1x128xf32> to vector<81x128xf32>
    %24 = arith.mulf %18, %23 : vector<81x128xf32>
    %cst_14 = arith.constant 9.99999993E-9 : f32
    %25 = vector.broadcast %cst_14 : f32 to vector<81x128xf32>
    %26 = arith.addf %24, %25 : vector<81x128xf32>
    %cst_15 = arith.constant 1.000000e+00 : f32
    %27 = vector.broadcast %cst_15 : f32 to vector<81x128xf32>
    %28 = arith.subf %27, %26 : vector<81x128xf32>
    %29 = arith.mulf %28, %28 : vector<81x128xf32>
    %30 = tpu.iota {dimensions = array<i32: 0>} : vector<81x128xi32>
    %31 = vector.broadcast %9 : vector<1x128xi32> to vector<81x128xi32>
    %32 = arith.cmpi eq, %30, %31 : vector<81x128xi32>
    %cst_16 = arith.constant 1.00000095 : f32
    %cst_17 = arith.constant 9.99999997E-7 : f32
    %33 = vector.broadcast %cst_16 : f32 to vector<81x128xf32>
    %34 = vector.broadcast %cst_17 : f32 to vector<81x128xf32>
    %35 = arith.select %32, %33, %34 : vector<81x128xi1>, vector<81x128xf32>
    %36 = arith.mulf %35, %29 : vector<81x128xf32>
    %37 = arith.addf %15, %22 : vector<1x128xf32>
    %38 = vector.broadcast %37 : vector<1x128xf32> to vector<81x128xf32>
    %39 = arith.subf %38, %4 : vector<81x128xf32>
    %40 = vector.broadcast %11 : vector<1x128xf32> to vector<81x128xf32>
    %41 = arith.subf %6, %40 : vector<81x128xf32>
    %42 = math.absf %41 : vector<81x128xf32>
    %43 = arith.mulf %36, %39 : vector<81x128xf32>
    %cst_18 = arith.constant dense<0.000000e+00> : vector<128xf32>
    %44 = vector.multi_reduction <add>, %43, %cst_18 [0] : vector<81x128xf32> to vector<128xf32>
    %45 = vector.shape_cast %44 : vector<128xf32> to vector<1x128xf32>
    %46 = arith.mulf %36, %42 : vector<81x128xf32>
    %cst_19 = arith.constant dense<0.000000e+00> : vector<128xf32>
    %47 = vector.multi_reduction <add>, %46, %cst_19 [0] : vector<81x128xf32> to vector<128xf32>
    %48 = vector.shape_cast %47 : vector<128xf32> to vector<1x128xf32>
    %c0_20 = arith.constant 0 : index
    %c0_21 = arith.constant 0 : index
    %c0_22 = arith.constant 0 : index
    %c0_23 = arith.constant 0 : index
    %49 = vector.load %arg6[%c0_20, %c0_21, %c0_22, %c0_23] : memref<1x1x1x1xf32, #tpu.memory_space<vmem>>, vector<1x1x1x1xf32>
    %50 = vector.shape_cast %49 : vector<1x1x1x1xf32> to vector<1x1xf32>
    %51 = arith.mulf %45, %13 : vector<1x128xf32>
    %cst_24 = arith.constant dense<0.000000e+00> : vector<1xf32>
    %52 = vector.multi_reduction <add>, %51, %cst_24 [1] : vector<1x128xf32> to vector<1xf32>
    %53 = vector.shape_cast %52 : vector<1xf32> to vector<1x1xf32>
    %54 = arith.addf %50, %53 : vector<1x1xf32>
    %c0_25 = arith.constant 0 : index
    %c0_26 = arith.constant 0 : index
    %c0_27 = arith.constant 0 : index
    %c0_28 = arith.constant 0 : index
    %55 = vector.load %arg6[%c0_25, %c0_26, %c0_27, %c0_28] : memref<1x1x1x1xf32, #tpu.memory_space<vmem>>, vector<1x1x1x1xf32>
    %56 = vector.shape_cast %55 : vector<1x1x1x1xf32> to vector<1x1xf32>
    %57 = vector.shape_cast %54 : vector<1x1xf32> to vector<1x1x1x1xf32>
    tpu.vector_store %arg6[%c0_25, %c0_26, %c0_27, %c0_28], %57 {strides = array<i32>} : memref<1x1x1x1xf32, #tpu.memory_space<vmem>>, vector<1x1x1x1xf32>,
    %c0_29 = arith.constant 0 : index
    %c0_30 = arith.constant 0 : index
    %c0_31 = arith.constant 0 : index
    %c0_32 = arith.constant 0 : index
    %58 = vector.load %arg7[%c0_29, %c0_30, %c0_31, %c0_32] : memref<1x1x1x1xf32, #tpu.memory_space<vmem>>, vector<1x1x1x1xf32>
    %59 = vector.shape_cast %58 : vector<1x1x1x1xf32> to vector<1x1xf32>
    %60 = arith.mulf %48, %13 : vector<1x128xf32>
    %cst_33 = arith.constant dense<0.000000e+00> : vector<1xf32>
    %61 = vector.multi_reduction <add>, %60, %cst_33 [1] : vector<1x128xf32> to vector<1xf32>
    %62 = vector.shape_cast %61 : vector<1xf32> to vector<1x1xf32>
    %63 = arith.addf %59, %62 : vector<1x1xf32>
    %c0_34 = arith.constant 0 : index
    %c0_35 = arith.constant 0 : index
    %c0_36 = arith.constant 0 : index
    %c0_37 = arith.constant 0 : index
    %64 = vector.load %arg7[%c0_34, %c0_35, %c0_36, %c0_37] : memref<1x1x1x1xf32, #tpu.memory_space<vmem>>, vector<1x1x1x1xf32>
    %65 = vector.shape_cast %64 : vector<1x1x1x1xf32> to vector<1x1xf32>
    %66 = vector.shape_cast %63 : vector<1x1xf32> to vector<1x1x1x1xf32>
    tpu.vector_store %arg7[%c0_34, %c0_35, %c0_36, %c0_37], %66 {strides = array<i32>} : memref<1x1x1x1xf32, #tpu.memory_space<vmem>>, vector<1x1x1x1xf32>,
    return
  }
  func.func @transform_0(%arg0: i32, %arg1: i32, %arg2: i32) -> (i32, i32, i32) {
    %c4_i32 = arith.constant 4 : i32
    %0 = arith.muli %arg1, %c4_i32 : i32
    %1 = arith.addi %0, %arg2 : i32
    %c0_i32 = arith.constant 0 : i32
    %c0_i32_0 = arith.constant 0 : i32
    return %arg0, %c0_i32, %1 : i32, i32, i32
  }
  func.func @transform_1(%arg0: i32, %arg1: i32, %arg2: i32) -> (i32, i32, i32) {
    %c4_i32 = arith.constant 4 : i32
    %0 = arith.muli %arg1, %c4_i32 : i32
    %1 = arith.addi %0, %arg2 : i32
    %c0_i32 = arith.constant 0 : i32
    %c0_i32_0 = arith.constant 0 : i32
    return %arg0, %c0_i32, %1 : i32, i32, i32
  }
  func.func @transform_2(%arg0: i32, %arg1: i32, %arg2: i32) -> (i32, i32, i32) {
    %c4_i32 = arith.constant 4 : i32
    %0 = arith.muli %arg1, %c4_i32 : i32
    %1 = arith.addi %0, %arg2 : i32
    %c0_i32 = arith.constant 0 : i32
    %c0_i32_0 = arith.constant 0 : i32
    return %arg0, %c0_i32, %1 : i32, i32, i32
  }
  func.func @transform_3(%arg0: i32, %arg1: i32, %arg2: i32) -> (i32, i32, i32, i32) {
    %c0_i32 = arith.constant 0 : i32
    %c0_i32_0 = arith.constant 0 : i32
    %c0_i32_1 = arith.constant 0 : i32
    return %arg0, %arg1, %c0_i32, %c0_i32_0 : i32, i32, i32, i32
  }
  func.func @transform_4(%arg0: i32, %arg1: i32, %arg2: i32) -> (i32, i32, i32, i32) {
    %c0_i32 = arith.constant 0 : i32
    %c0_i32_0 = arith.constant 0 : i32
    %c0_i32_1 = arith.constant 0 : i32
    return %arg0, %arg1, %c0_i32, %c0_i32_0 : i32, i32, i32, i32
  }
}

</mosaic_0001>

<llo_original>
// kernel: custom-call.1
$region0: #{custom-call.1}
  %s0 = inlined_call_operand.vmem [shape: pred[2,32,32], index: 0, kind: output, shape index: {}]

// kernel: custom-call
$region0: #{custom-call}
  %s0 = inlined_call_operand.vmem [shape: f32[2,32,32], index: 0, kind: output, shape index: {}]

// kernel: ddn_with_residual_loss.1
$region0: #{ddn_with_residual_loss.1}
  #allocation0 [shape = 'u32[]', space=smem, size = 0x4, offset = 0x4, fixed_abs, tag = 'smem constant byte address 0x4 - core index']
  #allocation1 [shape = 'u32[144,128]{1,0:T(1,128)}', space=vmem, size = 0x12000, scoped, tag = 'internal scratch']
  %s0 = inlined_call_operand.vmem [shape: f32[2,81,1024], index: 0, kind: input, shape index: {}]
  %s1 = inlined_call_operand.vmem [shape: f32[2,81,1024], index: 1, kind: input, shape index: {}]
  %s2 = inlined_call_operand.vmem [shape: f32[2,3,1024], index: 2, kind: input, shape index: {}]
  %s3 = inlined_call_operand.vmem [shape: f32[2,2,1,1], index: 3, kind: output, shape index: {0}]
  %s4 = inlined_call_operand.vmem [shape: f32[2,2,1,1], index: 4, kind: output, shape index: {1}]
  %5 = xla_tuple %s3, %s4
  %s6 = sld [smem:[#allocation0]]
  $region133: #{ddn_with_residual_loss.1} parent=0
    _
  %s8 = ssub.s32 1, %s6
  %s9 = scalar_select 0, %s8, %s6
  $region1: #{ddn_with_residual_loss.1} parent=0
    #allocation2 [shape = 'u8[90112]{0}', space=vmem, size = 0x16000, scoped, tag = 'input window, operand 0']
    #allocation3 [shape = 'u8[90112]{0}', space=vmem, size = 0x16000, scoped, tag = 'input window, operand 1']
    loop: start=0, step=1, limit=18
    $region2: #{ddn_with_residual_loss.1} parent=1 // loop_pre_header
      _
    $region3: #{ddn_with_residual_loss.1} parent=1 // loop_header
      %s11 = sphi 0, %s15
      %p12 = scmp.ge.s32.totalorder %s11, 18
      %s18 = sphi 0, %s37
      %s19 = sphi 0, %s33
      %s20 = sphi 0, %s29
      %s21 = sphi 0, %s18
      %s22 = sphi 0, %s19
      %s23 = sphi 0, %s20
      %s24 = sphi 0, %s21
      %s25 = sphi 0, %s22
      %s26 = sphi 0, %s23
      %s46 = sphi 0, %s48
      %s49 = sphi 0, %s46
      %s50 = sphi 0, %s49
      %s66 = sphi 0, %s50
      %s78 = sphi 0, %s80
      %s81 = sphi 0, %s78
      %s82 = sphi 0, %s81
      %s98 = sphi 0, %s82
      %s110 = sphi 0, %s112
      %s113 = sphi 0, %s110
      %s114 = sphi 0, %s113
      %s130 = sphi 0, %s114
      %s138 = sphi 0, %s140
      %s141 = sphi 0, %s138
      %s142 = sphi 0, %s141
      %s158 = sphi 0, %s142
      %s166 = sphi 0, %s168
      %s169 = sphi 0, %s166
      %s170 = sphi 0, %s169
      %s186 = sphi 0, %s170
    $region4: #{ddn_with_residual_loss.1} parent=1 // loop_header_branch
      %14 = sbr.rel (%p12) target = $region8
    $region5: #{ddn_with_residual_loss.1} parent=1 // loop_body
      %s16 = ssub.s32 %s11, 1
      %s17 = ssub.s32 %s11, 2
      %s27 = sadd.s32 1, %s20
      %p28 = scmp.ge.s32.totalorder %s27, 4
      %s29 = scalar_select %p28, 0, %s27
      %s30 = sadd.s32 1, %s19
      %s31 = scalar_select %p28, %s30, %s19
      %p32 = scmp.ge.s32.totalorder %s31, 2
      %s33 = scalar_select %p32, 0, %s31
      %s34 = sadd.s32 1, %s18
      %s35 = scalar_select %p32, %s34, %s18
      %p36 = scmp.ge.s32.totalorder %s35, 2
      %s37 = scalar_select %p36, 0, %s35
      %s38 = smul.u32 %s19, 4
      %s39 = sadd.s32 %s38, %s20
      %s40 = smul.u32 %s33, 4
      %s41 = sadd.s32 %s40, %s29
      %s42 = ssub.s32 %s18, %s37
      %s43 = ssub.s32 %s39, %s41
      %s44 = sor.u32 %s42, %s43
      %p45 = scmp.eq.s32.totalorder %s44, 0
      %s47 = sadd.s32 %s46, 1
      %s48 = scalar_select %p45, %s46, %s47
      %p51 = pneg %p45
      %p52 = scmp.eq.s32.totalorder %s11, 15
      %p53 = por %p51, %p52
      %p54 = scmp.ne.s32.totalorder %s46, %s49
      %p55 = scmp.eq.s32.totalorder %s11, 0
      %p56 = por %p54, %p55
      %p57 = scmp.ne.s32.totalorder %s46, %s49
      %p58 = scmp.eq.s32.totalorder %s16, 15
      %p59 = por %p57, %p58
      %p60 = scmp.ne.s32.totalorder %s49, %s50
      %p61 = scmp.eq.s32.totalorder %s16, 0
      %p62 = por %p60, %p61
      %p63 = scmp.ne.s32.totalorder %s49, %s50
      %p64 = scmp.eq.s32.totalorder %s17, 15
      %p65 = por %p63, %p64
      %p67 = scmp.ne.s32.totalorder %s50, %s66
      %p68 = scmp.eq.s32.totalorder %s17, 0
      %p69 = por %p67, %p68
      %s70 = smul.u32 %s19, 4
      %s71 = sadd.s32 %s70, %s20
      %s72 = smul.u32 %s33, 4
      %s73 = sadd.s32 %s72, %s29
      %s74 = ssub.s32 %s18, %s37
      %s75 = ssub.s32 %s71, %s73
      %s76 = sor.u32 %s74, %s75
      %p77 = scmp.eq.s32.totalorder %s76, 0
      %s79 = sadd.s32 %s78, 1
      %s80 = scalar_select %p77, %s78, %s79
      %p83 = pneg %p77
      %p84 = scmp.eq.s32.totalorder %s11, 15
      %p85 = por %p83, %p84
      %p86 = scmp.ne.s32.totalorder %s78, %s81
      %p87 = scmp.eq.s32.totalorder %s11, 0
      %p88 = por %p86, %p87
      %p89 = scmp.ne.s32.totalorder %s78, %s81
      %p90 = scmp.eq.s32.totalorder %s16, 15
      %p91 = por %p89, %p90
      %p92 = scmp.ne.s32.totalorder %s81, %s82
      %p93 = scmp.eq.s32.totalorder %s16, 0
      %p94 = por %p92, %p93
      %p95 = scmp.ne.s32.totalorder %s81, %s82
      %p96 = scmp.eq.s32.totalorder %s17, 15
      %p97 = por %p95, %p96
      %p99 = scmp.ne.s32.totalorder %s82, %s98
      %p100 = scmp.eq.s32.totalorder %s17, 0
      %p101 = por %p99, %p100
      %s102 = smul.u32 %s19, 4
      %s103 = sadd.s32 %s102, %s20
      %s104 = smul.u32 %s33, 4
      %s105 = sadd.s32 %s104, %s29
      %s106 = ssub.s32 %s18, %s37
      %s107 = ssub.s32 %s103, %s105
      %s108 = sor.u32 %s106, %s107
      %p109 = scmp.eq.s32.totalorder %s108, 0
      %s111 = sadd.s32 %s110, 1
      %s112 = scalar_select %p109, %s110, %s111
      %p115 = pneg %p109
      %p116 = scmp.eq.s32.totalorder %s11, 15
      %p117 = por %p115, %p116
      %p118 = scmp.ne.s32.totalorder %s110, %s113
      %p119 = scmp.eq.s32.totalorder %s11, 0
      %p120 = por %p118, %p119
      %p121 = scmp.ne.s32.totalorder %s110, %s113
      %p122 = scmp.eq.s32.totalorder %s16, 15
      %p123 = por %p121, %p122
      %p124 = scmp.ne.s32.totalorder %s113, %s114
      %p125 = scmp.eq.s32.totalorder %s16, 0
      %p126 = por %p124, %p125
      %p127 = scmp.ne.s32.totalorder %s113, %s114
      %p128 = scmp.eq.s32.totalorder %s17, 15
      %p129 = por %p127, %p128
      %p131 = scmp.ne.s32.totalorder %s114, %s130
      %p132 = scmp.eq.s32.totalorder %s17, 0
      %p133 = por %p131, %p132
      %s134 = ssub.s32 %s18, %s37
      %s135 = ssub.s32 %s19, %s33
      %s136 = sor.u32 %s134, %s135
      %p137 = scmp.eq.s32.totalorder %s136, 0
      %s139 = sadd.s32 %s138, 1
      %s140 = scalar_select %p137, %s138, %s139
      %p143 = pneg %p137
      %p144 = scmp.eq.s32.totalorder %s11, 15
      %p145 = por %p143, %p144
      %p146 = scmp.ne.s32.totalorder %s138, %s141
      %p147 = scmp.eq.s32.totalorder %s11, 0
      %p148 = por %p146, %p147
      %p149 = scmp.ne.s32.totalorder %s138, %s141
      %p150 = scmp.eq.s32.totalorder %s16, 15
      %p151 = por %p149, %p150
      %p152 = scmp.ne.s32.totalorder %s141, %s142
      %p153 = scmp.eq.s32.totalorder %s16, 0
      %p154 = por %p152, %p153
      %p155 = scmp.ne.s32.totalorder %s141, %s142
      %p156 = scmp.eq.s32.totalorder %s17, 15
      %p157 = por %p155, %p156
      %p159 = scmp.ne.s32.totalorder %s142, %s158
      %p160 = scmp.eq.s32.totalorder %s17, 0
      %p161 = por %p159, %p160
      %s162 = ssub.s32 %s18, %s37
      %s163 = ssub.s32 %s19, %s33
      %s164 = sor.u32 %s162, %s163
      %p165 = scmp.eq.s32.totalorder %s164, 0
      %s167 = sadd.s32 %s166, 1
      %s168 = scalar_select %p165, %s166, %s167
      %p171 = pneg %p165
      %p172 = scmp.eq.s32.totalorder %s11, 15
      %p173 = por %p171, %p172
      %p174 = scmp.ne.s32.totalorder %s166, %s169
      %p175 = scmp.eq.s32.totalorder %s11, 0
      %p176 = por %p174, %p175
      %p177 = scmp.ne.s32.totalorder %s166, %s169
      %p178 = scmp.eq.s32.totalorder %s16, 15
      %p179 = por %p177, %p178
      %p180 = scmp.ne.s32.totalorder %s169, %s170
      %p181 = scmp.eq.s32.totalorder %s16, 0
      %p182 = por %p180, %p181
      %p183 = scmp.ne.s32.totalorder %s169, %s170
      %p184 = scmp.eq.s32.totalorder %s17, 15
      %p185 = por %p183, %p184
      %p187 = scmp.ne.s32.totalorder %s170, %s186
      %p188 = scmp.eq.s32.totalorder %s17, 0
      %p189 = por %p187, %p188
      %p190 = scmp.le.s32.totalorder 1, %s11
      %p191 = scmp.lt.s32.totalorder %s11, 17
      %p192 = pnand %p190, %p191
      %p193 = pneg %p192
      // Predicated region
      $region9: #{ddn_with_residual_loss.1} parent=5 // pred_check
        _
      $region10: #{ddn_with_residual_loss.1} parent=5 // pred_check_branch
        %195 = sbr.rel (%p192) target = $region12
      $region11: #{ddn_with_residual_loss.1} parent=5 // pred_region
        %s196 = ssub.s32 %s11, 1
      $region12: #{ddn_with_residual_loss.1} parent=5 // pred_fallthru
        _
      %p197 = scmp.lt.s32.totalorder %s11, 16
      // Predicated region
      $region13: #{ddn_with_residual_loss.1} parent=5 // pred_check
        %p198 = pneg %p197
      $region14: #{ddn_with_residual_loss.1} parent=5 // pred_check_branch
        %200 = sbr.rel (%p198) target = $region16
      $region15: #{ddn_with_residual_loss.1} parent=5 // pred_region
        // Predicated region
        $region17: #{ddn_with_residual_loss.1} parent=15 // pred_check
          %p201 = pneg %p56
        $region18: #{ddn_with_residual_loss.1} parent=15 // pred_check_branch
          %203 = sbr.rel (%p201) target = $region20
        $region19: #{ddn_with_residual_loss.1} parent=15 // pred_region
          %s204 = sand.u32 %s46, 1
          %s205 = sand.u32 %s46, 1
          %s206 = smul.addr %s205, 88
          %s207 = scalar_lea.vmem [#allocation2], %s206
          %s208 = smul.u32 %s19, 4
          %s209 = sadd.s32 %s208, %s20
          %s210 = smul.addr %s18, 88
          %s211 = sadd.s32 %s209, %s210
          %s212 = smul.addr %s211, 8
          %s213 = scalar_lea.vmem %s0, %s212
          // Predicated region
          $region21: #{ddn_with_residual_loss.1} parent=19 // pred_check
            _
          $region22: #{ddn_with_residual_loss.1} parent=19 // pred_check_branch
            %215 = sbr.rel (0) target = $region24
          $region23: #{ddn_with_residual_loss.1} parent=19 // pred_region
            // Predicated region
            $region25: #{ddn_with_residual_loss.1} parent=23 // pred_check
              _
            $region26: #{ddn_with_residual_loss.1} parent=23 // pred_check_branch
              %217 = sbr.rel (0) target = $region28
            $region27: #{ddn_with_residual_loss.1} parent=23 // pred_region
              // Predicated region
              $region40: #{ddn_with_residual_loss.1} parent=27 // pred_check
                _
              $region41: #{ddn_with_residual_loss.1} parent=27 // pred_check_branch
                %252 = sbr.rel (0) target = $region43
              $region42: #{ddn_with_residual_loss.1} parent=27 // pred_region
                loop: start=0, step=1, limit=1
                $region44: #{ddn_with_residual_loss.1} parent=42 // loop_pre_header
                  _
                $region45: #{ddn_with_residual_loss.1} parent=42 // loop_header
                  %s254 = sphi 0, %s258
                  %p255 = scmp.ge.s32.totalorder %s254, 1
                  %s259 = sphi %s213, %s213
                  %s260 = sphi %s207, %s207
                $region46: #{ddn_with_residual_loss.1} parent=42 // loop_header_branch
                  %257 = sbr.rel (%p255) target = $region50
                $region47: #{ddn_with_residual_loss.1} parent=42 // loop_body
                  %v261 = vld [vmem:[%s259] sm:$0xff]
                  %262 = vst [vmem:[%s260] sm:$0xff] %v261
                  %v263 = vld [vmem:[%s259 + $0x40] sm:$0xff]
                  %264 = vst [vmem:[%s260 + $0x8] sm:$0xff] %v263
                  %v265 = vld [vmem:[%s259 + $0x80] sm:$0xff]
                  %266 = vst [vmem:[%s260 + $0x10] sm:$0xff] %v265
                  %v267 = vld [vmem:[%s259 + $0xc0] sm:$0xff]
                  %268 = vst [vmem:[%s260 + $0x18] sm:$0xff] %v267
                  %v269 = vld [vmem:[%s259 + $0x100] sm:$0xff]
                  %270 = vst [vmem:[%s260 + $0x20] sm:$0xff] %v269
                  %v271 = vld [vmem:[%s259 + $0x140] sm:$0xff]
                  %272 = vst [vmem:[%s260 + $0x28] sm:$0xff] %v271
                  %v273 = vld [vmem:[%s259 + $0x180] sm:$0xff]
                  %274 = vst [vmem:[%s260 + $0x30] sm:$0xff] %v273
                  %v275 = vld [vmem:[%s259 + $0x1c0] sm:$0xff]
                  %276 = vst [vmem:[%s260 + $0x38] sm:$0xff] %v275
                  %v277 = vld [vmem:[%s259 + $0x200] sm:$0xff]
                  %278 = vst [vmem:[%s260 + $0x40] sm:$0xff] %v277
                  %v279 = vld [vmem:[%s259 + $0x240] sm:$0xff]
                  %280 = vst [vmem:[%s260 + $0x48] sm:$0xff] %v279
                  %v281 = vld [vmem:[%s259 + $0x280] sm:$0xff]
                  %282 = vst [vmem:[%s260 + $0x50] sm:$0xff] %v281
                $region48: #{ddn_with_residual_loss.1} parent=42 // loop_footer
                  %s258 = sadd.s32 1, %s254
                $region49: #{ddn_with_residual_loss.1} parent=42 // loop_footer_branch
                  %253 = sbr.rel target = $region45
                $region50: #{ddn_with_residual_loss.1} parent=42 // loop_exit
                  _
              $region43: #{ddn_with_residual_loss.1} parent=27 // pred_fallthru
                _
              // Predicated region
              $region51: #{ddn_with_residual_loss.1} parent=27 // pred_check
                _
              $region52: #{ddn_with_residual_loss.1} parent=27 // pred_check_branch
                %284 = sbr.rel target = $region54
              $region53: #{ddn_with_residual_loss.1} parent=27 // pred_region
                _
              $region54: #{ddn_with_residual_loss.1} parent=27 // pred_fallthru
                _
            $region28: #{ddn_with_residual_loss.1} parent=23 // pred_fallthru
              _
            // Predicated region
            $region29: #{ddn_with_residual_loss.1} parent=23 // pred_check
              _
            $region30: #{ddn_with_residual_loss.1} parent=23 // pred_check_branch
              %219 = sbr.rel target = $region32
            $region31: #{ddn_with_residual_loss.1} parent=23 // pred_region
              loop: start=0, step=1, limit=1
              $region33: #{ddn_with_residual_loss.1} parent=31 // loop_pre_header
                _
              $region34: #{ddn_with_residual_loss.1} parent=31 // loop_header
                %s222 = sphi 0, %s226
                %p223 = scmp.ge.s32.totalorder %s222, 1
                %s227 = sphi %s213, %s213
                %s228 = sphi %s207, %s207
              $region35: #{ddn_with_residual_loss.1} parent=31 // loop_header_branch
                %225 = sbr.rel (%p223) target = $region39
              $region36: #{ddn_with_residual_loss.1} parent=31 // loop_body
                %v229 = vld [vmem:[%s227] sm:$0xff]
                %230 = vst [vmem:[%s228] sm:$0xff] %v229
                %v231 = vld [vmem:[%s227 + $0x40] sm:$0xff]
                %232 = vst [vmem:[%s228 + $0x8] sm:$0xff] %v231
                %v233 = vld [vmem:[%s227 + $0x80] sm:$0xff]
                %234 = vst [vmem:[%s228 + $0x10] sm:$0xff] %v233
                %v235 = vld [vmem:[%s227 + $0xc0] sm:$0xff]
                %236 = vst [vmem:[%s228 + $0x18] sm:$0xff] %v235
                %v237 = vld [vmem:[%s227 + $0x100] sm:$0xff]
                %238 = vst [vmem:[%s228 + $0x20] sm:$0xff] %v237
                %v239 = vld [vmem:[%s227 + $0x140] sm:$0xff]
                %240 = vst [vmem:[%s228 + $0x28] sm:$0xff] %v239
                %v241 = vld [vmem:[%s227 + $0x180] sm:$0xff]
                %242 = vst [vmem:[%s228 + $0x30] sm:$0xff] %v241
                %v243 = vld [vmem:[%s227 + $0x1c0] sm:$0xff]
                %244 = vst [vmem:[%s228 + $0x38] sm:$0xff] %v243
                %v245 = vld [vmem:[%s227 + $0x200] sm:$0xff]
                %246 = vst [vmem:[%s228 + $0x40] sm:$0xff] %v245
                %v247 = vld [vmem:[%s227 + $0x240] sm:$0xff]
                %248 = vst [vmem:[%s228 + $0x48] sm:$0xff] %v247
                %v249 = vld [vmem:[%s227 + $0x280] sm:$0xff]
                %250 = vst [vmem:[%s228 + $0x50] sm:$0xff] %v249
              $region37: #{ddn_with_residual_loss.1} parent=31 // loop_footer
                %s226 = sadd.s32 1, %s222
              $region38: #{ddn_with_residual_loss.1} parent=31 // loop_footer_branch
                %221 = sbr.rel target = $region34
              $region39: #{ddn_with_residual_loss.1} parent=31 // loop_exit
                _
            $region32: #{ddn_with_residual_loss.1} parent=23 // pred_fallthru
              _
          $region24: #{ddn_with_residual_loss.1} parent=19 // pred_fallthru
            _
          %285 = vnop
        $region20: #{ddn_with_residual_loss.1} parent=15 // pred_fallthru
          _
        // Predicated region
        $region55: #{ddn_with_residual_loss.1} parent=15 // pred_check
          %p286 = pneg %p88
        $region56: #{ddn_with_residual_loss.1} parent=15 // pred_check_branch
          %288 = sbr.rel (%p286) target = $region58
        $region57: #{ddn_with_residual_loss.1} parent=15 // pred_region
          %s289 = sand.u32 %s78, 1
          %s290 = sand.u32 %s78, 1
          %s291 = smul.addr %s290, 88
          %s292 = scalar_lea.vmem [#allocation3], %s291
          %s293 = smul.u32 %s19, 4
          %s294 = sadd.s32 %s293, %s20
          %s295 = smul.addr %s18, 88
          %s296 = sadd.s32 %s294, %s295
          %s297 = smul.addr %s296, 8
          %s298 = scalar_lea.vmem %s1, %s297
          // Predicated region
          $region59: #{ddn_with_residual_loss.1} parent=57 // pred_check
            _
          $region60: #{ddn_with_residual_loss.1} parent=57 // pred_check_branch
            %300 = sbr.rel (0) target = $region62
          $region61: #{ddn_with_residual_loss.1} parent=57 // pred_region
            // Predicated region
            $region63: #{ddn_with_residual_loss.1} parent=61 // pred_check
              _
            $region64: #{ddn_with_residual_loss.1} parent=61 // pred_check_branch
              %302 = sbr.rel (0) target = $region66
            $region65: #{ddn_with_residual_loss.1} parent=61 // pred_region
              // Predicated region
              $region78: #{ddn_with_residual_loss.1} parent=65 // pred_check
                _
              $region79: #{ddn_with_residual_loss.1} parent=65 // pred_check_branch
                %337 = sbr.rel (0) target = $region81
              $region80: #{ddn_with_residual_loss.1} parent=65 // pred_region
                loop: start=0, step=1, limit=1
                $region82: #{ddn_with_residual_loss.1} parent=80 // loop_pre_header
                  _
                $region83: #{ddn_with_residual_loss.1} parent=80 // loop_header
                  %s339 = sphi 0, %s343
                  %p340 = scmp.ge.s32.totalorder %s339, 1
                  %s344 = sphi %s298, %s298
                  %s345 = sphi %s292, %s292
                $region84: #{ddn_with_residual_loss.1} parent=80 // loop_header_branch
                  %342 = sbr.rel (%p340) target = $region88
                $region85: #{ddn_with_residual_loss.1} parent=80 // loop_body
                  %v346 = vld [vmem:[%s344] sm:$0xff]
                  %347 = vst [vmem:[%s345] sm:$0xff] %v346
                  %v348 = vld [vmem:[%s344 + $0x40] sm:$0xff]
                  %349 = vst [vmem:[%s345 + $0x8] sm:$0xff] %v348
                  %v350 = vld [vmem:[%s344 + $0x80] sm:$0xff]
                  %351 = vst [vmem:[%s345 + $0x10] sm:$0xff] %v350
                  %v352 = vld [vmem:[%s344 + $0xc0] sm:$0xff]
                  %353 = vst [vmem:[%s345 + $0x18] sm:$0xff] %v352
                  %v354 = vld [vmem:[%s344 + $0x100] sm:$0xff]
                  %355 = vst [vmem:[%s345 + $0x20] sm:$0xff] %v354
                  %v356 = vld [vmem:[%s344 + $0x140] sm:$0xff]
                  %357 = vst [vmem:[%s345 + $0x28] sm:$0xff] %v356
                  %v358 = vld [vmem:[%s344 + $0x180] sm:$0xff]
                  %359 = vst [vmem:[%s345 + $0x30] sm:$0xff] %v358
                  %v360 = vld [vmem:[%s344 + $0x1c0] sm:$0xff]
                  %361 = vst [vmem:[%s345 + $0x38] sm:$0xff] %v360
                  %v362 = vld [vmem:[%s344 + $0x200] sm:$0xff]
                  %363 = vst [vmem:[%s345 + $0x40] sm:$0xff] %v362
                  %v364 = vld [vmem:[%s344 + $0x240] sm:$0xff]
                  %365 = vst [vmem:[%s345 + $0x48] sm:$0xff] %v364
                  %v366 = vld [vmem:[%s344 + $0x280] sm:$0xff]
                  %367 = vst [vmem:[%s345 + $0x50] sm:$0xff] %v366
                $region86: #{ddn_with_residual_loss.1} parent=80 // loop_footer
                  %s343 = sadd.s32 1, %s339
                $region87: #{ddn_with_residual_loss.1} parent=80 // loop_footer_branch
                  %338 = sbr.rel target = $region83
                $region88: #{ddn_with_residual_loss.1} parent=80 // loop_exit
                  _
              $region81: #{ddn_with_residual_loss.1} parent=65 // pred_fallthru
                _
              // Predicated region
              $region89: #{ddn_with_residual_loss.1} parent=65 // pred_check
                _
              $region90: #{ddn_with_residual_loss.1} parent=65 // pred_check_branch
                %369 = sbr.rel target = $region92
              $region91: #{ddn_with_residual_loss.1} parent=65 // pred_region
                _
              $region92: #{ddn_with_residual_loss.1} parent=65 // pred_fallthru
                _
            $region66: #{ddn_with_residual_loss.1} parent=61 // pred_fallthru
              _
            // Predicated region
            $region67: #{ddn_with_residual_loss.1} parent=61 // pred_check
              _
            $region68: #{ddn_with_residual_loss.1} parent=61 // pred_check_branch
              %304 = sbr.rel target = $region70
            $region69: #{ddn_with_residual_loss.1} parent=61 // pred_region
              loop: start=0, step=1, limit=1
              $region71: #{ddn_with_residual_loss.1} parent=69 // loop_pre_header
                _
              $region72: #{ddn_with_residual_loss.1} parent=69 // loop_header
                %s307 = sphi 0, %s311
                %p308 = scmp.ge.s32.totalorder %s307, 1
                %s312 = sphi %s298, %s298
                %s313 = sphi %s292, %s292
              $region73: #{ddn_with_residual_loss.1} parent=69 // loop_header_branch
                %310 = sbr.rel (%p308) target = $region77
              $region74: #{ddn_with_residual_loss.1} parent=69 // loop_body
                %v314 = vld [vmem:[%s312] sm:$0xff]
                %315 = vst [vmem:[%s313] sm:$0xff] %v314
                %v316 = vld [vmem:[%s312 + $0x40] sm:$0xff]
                %317 = vst [vmem:[%s313 + $0x8] sm:$0xff] %v316
                %v318 = vld [vmem:[%s312 + $0x80] sm:$0xff]
                %319 = vst [vmem:[%s313 + $0x10] sm:$0xff] %v318
                %v320 = vld [vmem:[%s312 + $0xc0] sm:$0xff]
                %321 = vst [vmem:[%s313 + $0x18] sm:$0xff] %v320
                %v322 = vld [vmem:[%s312 + $0x100] sm:$0xff]
                %323 = vst [vmem:[%s313 + $0x20] sm:$0xff] %v322
                %v324 = vld [vmem:[%s312 + $0x140] sm:$0xff]
                %325 = vst [vmem:[%s313 + $0x28] sm:$0xff] %v324
                %v326 = vld [vmem:[%s312 + $0x180] sm:$0xff]
                %327 = vst [vmem:[%s313 + $0x30] sm:$0xff] %v326
                %v328 = vld [vmem:[%s312 + $0x1c0] sm:$0xff]
                %329 = vst [vmem:[%s313 + $0x38] sm:$0xff] %v328
                %v330 = vld [vmem:[%s312 + $0x200] sm:$0xff]
                %331 = vst [vmem:[%s313 + $0x40] sm:$0xff] %v330
                %v332 = vld [vmem:[%s312 + $0x240] sm:$0xff]
                %333 = vst [vmem:[%s313 + $0x48] sm:$0xff] %v332
                %v334 = vld [vmem:[%s312 + $0x280] sm:$0xff]
                %335 = vst [vmem:[%s313 + $0x50] sm:$0xff] %v334
              $region75: #{ddn_with_residual_loss.1} parent=69 // loop_footer
                %s311 = sadd.s32 1, %s307
              $region76: #{ddn_with_residual_loss.1} parent=69 // loop_footer_branch
                %306 = sbr.rel target = $region72
              $region77: #{ddn_with_residual_loss.1} parent=69 // loop_exit
                _
            $region70: #{ddn_with_residual_loss.1} parent=61 // pred_fallthru
              _
          $region62: #{ddn_with_residual_loss.1} parent=57 // pred_fallthru
            _
          %370 = vnop
        $region58: #{ddn_with_residual_loss.1} parent=15 // pred_fallthru
          _
        // Predicated region
        $region93: #{ddn_with_residual_loss.1} parent=15 // pred_check
          %p371 = pneg %p120
        $region94: #{ddn_with_residual_loss.1} parent=15 // pred_check_branch
          %373 = sbr.rel (%p371) target = $region96
        $region95: #{ddn_with_residual_loss.1} parent=15 // pred_region
          %s374 = smul.u32 %s19, 4
          %s375 = sadd.s32 %s374, %s20
          %p376 = scmp.lt.s32.totalorder %s18, 1
          %s377 = scalar_select %p376, %s18, 1
          %p378 = scmp.lt.s32.totalorder %s375, 7
          %s379 = scalar_select %p378, %s375, 7
          %s380 = smul.addr %s377, 8
          %s381 = sadd.s32 %s379, %s380
          %s382 = smul.addr %s381, 4
          %s383 = scalar_lea.vmem %s2, %s382
          %s384 = smul.u32 %s19, 4
          %s385 = sadd.s32 %s384, %s20
        $region96: #{ddn_with_residual_loss.1} parent=15 // pred_fallthru
          _
      $region16: #{ddn_with_residual_loss.1} parent=5 // pred_fallthru
        _
      %p386 = scmp.le.s32.totalorder 1, %s11
      %p387 = scmp.lt.s32.totalorder %s11, 17
      %p388 = pnand %p386, %p387
      %p389 = pneg %p388
      // Predicated region
      $region97: #{ddn_with_residual_loss.1} parent=5 // pred_check
        _
      $region98: #{ddn_with_residual_loss.1} parent=5 // pred_check_branch
        %391 = sbr.rel (%p388) target = $region100
      $region99: #{ddn_with_residual_loss.1} parent=5 // pred_region
        %s392 = ssub.s32 %s11, 1
        %s393 = sand.u32 %s49, 1
        %s394 = sand.u32 %s49, 1
        %s395 = smul.addr %s394, 88
        %s396 = scalar_lea.vmem [#allocation2], %s395
        // Predicated region
        $region101: #{ddn_with_residual_loss.1} parent=99 // pred_check
          %p397 = pneg %p62
        $region102: #{ddn_with_residual_loss.1} parent=99 // pred_check_branch
          %399 = sbr.rel (%p397) target = $region104
        $region103: #{ddn_with_residual_loss.1} parent=99 // pred_region
          _
        $region104: #{ddn_with_residual_loss.1} parent=99 // pred_fallthru
          _
        %s400 = sand.u32 %s81, 1
        %s401 = sand.u32 %s81, 1
        %s402 = smul.addr %s401, 88
        %s403 = scalar_lea.vmem [#allocation3], %s402
        // Predicated region
        $region105: #{ddn_with_residual_loss.1} parent=99 // pred_check
          %p404 = pneg %p94
        $region106: #{ddn_with_residual_loss.1} parent=99 // pred_check_branch
          %406 = sbr.rel (%p404) target = $region108
        $region107: #{ddn_with_residual_loss.1} parent=99 // pred_region
          _
        $region108: #{ddn_with_residual_loss.1} parent=99 // pred_fallthru
          _
        %s407 = sand.u32 %s49, 1
        %s408 = sand.u32 %s49, 1
        %s409 = smul.addr %s408, 88
        %s410 = scalar_lea.vmem [#allocation2], %s409
        %p411 = pneg %p62
        %p412 = pneg %p59
        %s413 = sand.u32 %s81, 1
        %s414 = sand.u32 %s81, 1
        %s415 = smul.addr %s414, 88
        %s416 = scalar_lea.vmem [#allocation3], %s415
        %p417 = pneg %p94
        %p418 = pneg %p91
        %s419 = smul.u32 %s22, 4
        %s420 = sadd.s32 %s419, %s23
        %p421 = scmp.lt.s32.totalorder %s21, 1
        %s422 = scalar_select %p421, %s21, 1
        %p423 = scmp.lt.s32.totalorder %s420, 7
        %s424 = scalar_select %p423, %s420, 7
        %s425 = smul.addr %s422, 8
        %s426 = sadd.s32 %s424, %s425
        %s427 = smul.addr %s426, 4
        %s428 = scalar_lea.vmem %s2, %s427
        %p429 = pneg %p126
        %p430 = pneg %p123
        %p431 = pneg %p154
        %p432 = pneg %p151
        %p433 = scmp.lt.s32.totalorder %s21, 1
        %s434 = scalar_select %p433, %s21, 1
        %p435 = scmp.lt.s32.totalorder %s22, 1
        %s436 = scalar_select %p435, %s22, 1
        %s437 = smul.addr %s434, 2
        %s438 = sadd.s32 %s436, %s437
        %s439 = scalar_lea.vmem %s3, %s438
        %p440 = pneg %p182
        %p441 = pneg %p179
        %p442 = scmp.lt.s32.totalorder %s21, 1
        %s443 = scalar_select %p442, %s21, 1
        %p444 = scmp.lt.s32.totalorder %s22, 1
        %s445 = scalar_select %p444, %s22, 1
        %s446 = smul.addr %s443, 2
        %s447 = sadd.s32 %s445, %s446
        %s448 = scalar_lea.vmem %s4, %s447
        %s449 = smul.u32 %s22, 4
        %s450 = sadd.s32 %s449, %s23
        %s451 = smul.u32 %s22, 4
        %s452 = sadd.s32 %s451, %s23
        %s453 = smul.u32 %s22, 4
        %s454 = sadd.s32 %s453, %s23
        %p455 = scmp.lt.s32.totalorder %s21, 1
        %s456 = scalar_select %p455, %s21, 1
        %p457 = scmp.lt.s32.totalorder %s454, 7
        %s458 = scalar_select %p457, %s454, 7
        %s459 = smul.addr %s456, 8
        %s460 = sadd.s32 %s458, %s459
        %s461 = smul.addr %s460, 4
        %s462 = scalar_lea.vmem %s2, %s461
        %s463 = smul.u32 %s22, 4
        %s464 = sadd.s32 %s463, %s23
        %p465 = scmp.lt.s32.totalorder %s21, 1
        %s466 = scalar_select %p465, %s21, 1
        %p467 = scmp.lt.s32.totalorder %s22, 1
        %s468 = scalar_select %p467, %s22, 1
        %s469 = smul.addr %s466, 2
        %s470 = sadd.s32 %s468, %s469
        %s471 = scalar_lea.vmem %s3, %s470
        %p472 = scmp.lt.s32.totalorder %s21, 1
        %s473 = scalar_select %p472, %s21, 1
        %p474 = scmp.lt.s32.totalorder %s22, 1
        %s475 = scalar_select %p474, %s22, 1
        %s476 = smul.addr %s473, 2
        %s477 = sadd.s32 %s475, %s476
        %s478 = scalar_lea.vmem %s4, %s477
        %p479 = scmp.eq.s32.totalorder %s23, 0
        // Predicated region
        $region109: #{ddn_with_residual_loss.1} parent=99 // pred_check
          %p480 = pneg %p479
        $region110: #{ddn_with_residual_loss.1} parent=99 // pred_check_branch
          %482 = sbr.rel (%p480) target = $region112
        $region111: #{ddn_with_residual_loss.1} parent=99 // pred_region
          %vm483 = vcmask 0
          %484 = vst.msk [vmem:[%s471] sm:$0x1] %vm483, 0.0
          %485 = vst.msk [vmem:[%s478] sm:$0x1] %vm483, 0.0
        $region112: #{ddn_with_residual_loss.1} parent=99 // pred_fallthru
          _
        %v486 = vld [vmem:[%s396] sm:$0xff]
        %v487 = vld [vmem:[%s396 + $0x8] sm:$0xff]
        %v488 = vld [vmem:[%s396 + $0x10] sm:$0xff]
        %v489 = vld [vmem:[%s396 + $0x18] sm:$0xff]
        %v490 = vld [vmem:[%s396 + $0x20] sm:$0xff]
        %v491 = vld [vmem:[%s396 + $0x28] sm:$0xff]
        %v492 = vld [vmem:[%s396 + $0x30] sm:$0xff]
        %v493 = vld [vmem:[%s396 + $0x38] sm:$0xff]
        %v494 = vld [vmem:[%s396 + $0x40] sm:$0xff]
        %v495 = vld [vmem:[%s396 + $0x48] sm:$0xff]
        %v496 = vld [vmem:[%s396 + $0x50] sm:$0x1]
        %v497 = vld [vmem:[%s403] sm:$0xff]
        %v498 = vld [vmem:[%s403 + $0x8] sm:$0xff]
        %v499 = vld [vmem:[%s403 + $0x10] sm:$0xff]
        %v500 = vld [vmem:[%s403 + $0x18] sm:$0xff]
        %v501 = vld [vmem:[%s403 + $0x20] sm:$0xff]
        %v502 = vld [vmem:[%s403 + $0x28] sm:$0xff]
        %v503 = vld [vmem:[%s403 + $0x30] sm:$0xff]
        %v504 = vld [vmem:[%s403 + $0x38] sm:$0xff]
        %v505 = vld [vmem:[%s403 + $0x40] sm:$0xff]
        %v506 = vld [vmem:[%s403 + $0x48] sm:$0xff]
        %v507 = vld [vmem:[%s403 + $0x50] sm:$0x1]
        %v508 = vld [vmem:[%s462] sm:$0x1]
        %v509 = vcvt.f32.s32.to.zero.pseudo %v508
        %v510 = vld [vmem:[%s462 + $0x1] sm:$0x1]
        %v511 = vld [vmem:[%s462 + $0x2] sm:$0x1]
        %v512 = vmax.f32 %v486, %v490
        %v513 = vmax.f32 %v487, %v491
        %v514 = vmax.f32 %v488, %v492
        %v515 = vmax.f32 %v489, %v493
        %v516 = vmax.f32 %v512, %v494
        %v517 = vmax.f32 %v513, %v495
        %vm518 = vcmask 1040384
        %v519 = vsel %vm518, %v496, -inf
        %v520 = vmax.f32 %v514, %v519
        %v521 = vmax.f32 %v516, %v517
        %v522 = vmax.f32 %v520, %v515
        %v523 = vmax.f32 %v521, %v522
        %v524 = vrot.slane %v523, 4
        %v525 = vmax.f32 %v523, %v524
        %v526 = vrot.slane %v525, 2
        %v527 = vmax.f32 %v525, %v526
        %v528 = vrot.slane %v527, 1
        %v529 = vmax.f32 %v527, %v528
        %v530 = vsub.f32 %v486, %v529
        %v531 = vsub.f32 %v487, %v529
        %v532 = vsub.f32 %v488, %v529
        %v533 = vsub.f32 %v489, %v529
        %v534 = vsub.f32 %v490, %v529
        %v535 = vsub.f32 %v491, %v529
        %v536 = vsub.f32 %v492, %v529
        %v537 = vsub.f32 %v493, %v529
        %v538 = vsub.f32 %v494, %v529
        %v539 = vsub.f32 %v495, %v529
        %v540 = vsub.f32 %v496, %v529
        %v541 = vmul.f32 %v530, 1.442695
        %v542 = vpow.pop %v541
        %v543 = vmul.f32 %v531, 1.442695
        %v544 = vpow.pop %v543
        %v545 = vmul.f32 %v532, 1.442695
        %v546 = vpow.pop %v545
        %v547 = vmul.f32 %v533, 1.442695
        %v548 = vpow.pop %v547
        %v549 = vmul.f32 %v534, 1.442695
        %v550 = vpow.pop %v549
        %v551 = vmul.f32 %v535, 1.442695
        %v552 = vpow.pop %v551
        %v553 = vmul.f32 %v536, 1.442695
        %v554 = vpow.pop %v553
        %v555 = vmul.f32 %v537, 1.442695
        %v556 = vpow.pop %v555
        %v557 = vmul.f32 %v538, 1.442695
        %v558 = vpow.pop %v557
        %v559 = vmul.f32 %v539, 1.442695
        %v560 = vpow.pop %v559
        %v561 = vmul.f32 %v540, 1.442695
        %v562 = vpow.pop %v561
        %v563 = vadd.f32 %v542, %v544
        %v564 = vadd.f32 %v563, %v546
        %v565 = vadd.f32 %v564, %v548
        %v566 = vadd.f32 %v565, %v550
        %v567 = vadd.f32 %v566, %v552
        %v568 = vadd.f32 %v567, %v554
        %v569 = vadd.f32 %v568, %v556
        %v570 = vadd.f32 %v569, %v558
        %v571 = vadd.f32 %v570, %v560
        %v572 = vsel %vm518, %v562, 0.0
        %v573 = vadd.f32 %v571, %v572
        %v574 = vrot.slane %v573, 4
        %v575 = vadd.f32 %v573, %v574
        %v576 = vrot.slane %v575, 2
        %v577 = vadd.f32 %v575, %v576
        %v578 = vrot.slane %v577, 1
        %v579 = vadd.f32 %v577, %v578
        %v580 = vrcp.pop %v579
        %v581 = vlog2.pop %v579
        %v582 = vmul.f32 %v581, 0.6931472
        %v583 = vmul.f32 %v542, %v580
        %v584 = vmul.f32 %v544, %v580
        %v585 = vmul.f32 %v546, %v580
        %v586 = vmul.f32 %v548, %v580
        %v587 = vmul.f32 %v550, %v580
        %v588 = vmul.f32 %v552, %v580
        %v589 = vmul.f32 %v554, %v580
        %v590 = vmul.f32 %v556, %v580
        %v591 = vmul.f32 %v558, %v580
        %v592 = vmul.f32 %v560, %v580
        %v593 = vmul.f32 %v562, %v580
        %v594 = vadd.f32 %v583, 1e-08
        %v595 = vadd.f32 %v584, 1e-08
        %v596 = vadd.f32 %v585, 1e-08
        %v597 = vadd.f32 %v586, 1e-08
        %v598 = vadd.f32 %v587, 1e-08
        %v599 = vadd.f32 %v588, 1e-08
        %v600 = vadd.f32 %v589, 1e-08
        %v601 = vadd.f32 %v590, 1e-08
        %v602 = vadd.f32 %v591, 1e-08
        %v603 = vadd.f32 %v592, 1e-08
        %v604 = vadd.f32 %v593, 1e-08
        %v605 = vsub.f32 1.0, %v594
        %v606 = vsub.f32 1.0, %v595
        %v607 = vsub.f32 1.0, %v596
        %v608 = vsub.f32 1.0, %v597
        %v609 = vsub.f32 1.0, %v598
        %v610 = vsub.f32 1.0, %v599
        %v611 = vsub.f32 1.0, %v600
        %v612 = vsub.f32 1.0, %v601
        %v613 = vsub.f32 1.0, %v602
        %v614 = vsub.f32 1.0, %v603
        %v615 = vsub.f32 1.0, %v604
        %v616 = vmul.f32 %v605, %v605
        %v617 = vmul.f32 %v606, %v606
        %v618 = vmul.f32 %v607, %v607
        %v619 = vmul.f32 %v608, %v608
        %v620 = vmul.f32 %v609, %v609
        %v621 = vmul.f32 %v610, %v610
        %v622 = vmul.f32 %v611, %v611
        %v623 = vmul.f32 %v612, %v612
        %v624 = vmul.f32 %v613, %v613
        %v625 = vmul.f32 %v614, %v614
        %v626 = vmul.f32 %v615, %v615
        %v627 = vlaneseq
        %v628 = vshrl.u32 %v627, 7
        %v629 = vadd.s32 %v628, 8
        %v630 = vadd.s32 %v628, 16
        %v631 = vadd.s32 %v628, 24
        %v632 = vadd.s32 %v628, 32
        %v633 = vadd.s32 %v628, 40
        %v634 = vadd.s32 %v628, 48
        %v635 = vadd.s32 %v628, 56
        %v636 = vadd.s32 %v628, 64
        %v637 = vadd.s32 %v628, 72
        %v638 = vadd.s32 %v628, 80
        %v639 = vlaneseq
        %v640 = vshrl.u32 %v639, 7
        %v641 = vsub.s32 0, %v640
        %v642 = vrot.slane %v509, %v641
        %vm643 = vcmp.eq.s32.totalorder %v628, %v642
        %vm644 = vcmp.eq.s32.totalorder %v629, %v642
        %vm645 = vcmp.eq.s32.totalorder %v630, %v642
        %vm646 = vcmp.eq.s32.totalorder %v631, %v642
        %vm647 = vcmp.eq.s32.totalorder %v632, %v642
        %vm648 = vcmp.eq.s32.totalorder %v633, %v642
        %vm649 = vcmp.eq.s32.totalorder %v634, %v642
        %vm650 = vcmp.eq.s32.totalorder %v635, %v642
        %vm651 = vcmp.eq.s32.totalorder %v636, %v642
        %vm652 = vcmp.eq.s32.totalorder %v637, %v642
        %vm653 = vcmp.eq.s32.totalorder %v638, %v642
        %v654 = vsel %vm643, 1.000001, 1e-06
        %v655 = vsel %vm644, 1.000001, 1e-06
        %v656 = vsel %vm645, 1.000001, 1e-06
        %v657 = vsel %vm646, 1.000001, 1e-06
        %v658 = vsel %vm647, 1.000001, 1e-06
        %v659 = vsel %vm648, 1.000001, 1e-06
        %v660 = vsel %vm649, 1.000001, 1e-06
        %v661 = vsel %vm650, 1.000001, 1e-06
        %v662 = vsel %vm651, 1.000001, 1e-06
        %v663 = vsel %vm652, 1.000001, 1e-06
        %v664 = vsel %vm653, 1.000001, 1e-06
        %v665 = vmul.f32 %v654, %v616
        %v666 = vmul.f32 %v655, %v617
        %v667 = vmul.f32 %v656, %v618
        %v668 = vmul.f32 %v657, %v619
        %v669 = vmul.f32 %v658, %v620
        %v670 = vmul.f32 %v659, %v621
        %v671 = vmul.f32 %v660, %v622
        %v672 = vmul.f32 %v661, %v623
        %v673 = vmul.f32 %v662, %v624
        %v674 = vmul.f32 %v663, %v625
        %v675 = vmul.f32 %v664, %v626
        %v676 = vadd.f32 %v529, %v582
        %v677 = vsub.f32 %v676, %v486
        %v678 = vsub.f32 %v676, %v487
        %v679 = vsub.f32 %v676, %v488
        %v680 = vsub.f32 %v676, %v489
        %v681 = vsub.f32 %v676, %v490
        %v682 = vsub.f32 %v676, %v491
        %v683 = vsub.f32 %v676, %v492
        %v684 = vsub.f32 %v676, %v493
        %v685 = vsub.f32 %v676, %v494
        %v686 = vsub.f32 %v676, %v495
        %v687 = vsub.f32 %v676, %v496
        %v688 = vlaneseq
        %v689 = vshrl.u32 %v688, 7
        %v690 = vsub.s32 0, %v689
        %v691 = vrot.slane %v510, %v690
        %v692 = vsub.f32 %v497, %v691
        %v693 = vsub.f32 %v498, %v691
        %v694 = vsub.f32 %v499, %v691
        %v695 = vsub.f32 %v500, %v691
        %v696 = vsub.f32 %v501, %v691
        %v697 = vsub.f32 %v502, %v691
        %v698 = vsub.f32 %v503, %v691
        %v699 = vsub.f32 %v504, %v691
        %v700 = vsub.f32 %v505, %v691
        %v701 = vsub.f32 %v506, %v691
        %v702 = vsub.f32 %v507, %v691
        %v703 = vand.u32 2147483647, %v692
        %v704 = vand.u32 2147483647, %v693
        %v705 = vand.u32 2147483647, %v694
        %v706 = vand.u32 2147483647, %v695
        %v707 = vand.u32 2147483647, %v696
        %v708 = vand.u32 2147483647, %v697
        %v709 = vand.u32 2147483647, %v698
        %v710 = vand.u32 2147483647, %v699
        %v711 = vand.u32 2147483647, %v700
        %v712 = vand.u32 2147483647, %v701
        %v713 = vand.u32 2147483647, %v702
        %v714 = vmul.f32 %v665, %v677
        %v715 = vmul.f32 %v666, %v678
        %v716 = vmul.f32 %v667, %v679
        %v717 = vmul.f32 %v668, %v680
        %v718 = vmul.f32 %v669, %v681
        %v719 = vmul.f32 %v670, %v682
        %v720 = vmul.f32 %v671, %v683
        %v721 = vmul.f32 %v672, %v684
        %v722 = vmul.f32 %v673, %v685
        %v723 = vmul.f32 %v674, %v686
        %v724 = vmul.f32 %v675, %v687
        %v725 = vadd.f32 %v714, %v715
        %v726 = vadd.f32 %v725, %v716
        %v727 = vadd.f32 %v726, %v717
        %v728 = vadd.f32 %v727, %v718
        %v729 = vadd.f32 %v728, %v719
        %v730 = vadd.f32 %v729, %v720
        %v731 = vadd.f32 %v730, %v721
        %v732 = vadd.f32 %v731, %v722
        %v733 = vadd.f32 %v732, %v723
        %v734 = vsel %vm518, %v724, 0.0
        %v735 = vadd.f32 %v733, %v734
        %v736 = vrot.slane %v735, 4
        %v737 = vadd.f32 %v735, %v736
        %v738 = vrot.slane %v737, 2
        %v739 = vadd.f32 %v737, %v738
        %v740 = vrot.slane %v739, 1
        %v741 = vadd.f32 %v739, %v740
        %v742 = vmul.f32 %v665, %v703
        %v743 = vmul.f32 %v666, %v704
        %v744 = vmul.f32 %v667, %v705
        %v745 = vmul.f32 %v668, %v706
        %v746 = vmul.f32 %v669, %v707
        %v747 = vmul.f32 %v670, %v708
        %v748 = vmul.f32 %v671, %v709
        %v749 = vmul.f32 %v672, %v710
        %v750 = vmul.f32 %v673, %v711
        %v751 = vmul.f32 %v674, %v712
        %v752 = vmul.f32 %v675, %v713
        %v753 = vadd.f32 %v742, %v743
        %v754 = vadd.f32 %v753, %v744
        %v755 = vadd.f32 %v754, %v745
        %v756 = vadd.f32 %v755, %v746
        %v757 = vadd.f32 %v756, %v747
        %v758 = vadd.f32 %v757, %v748
        %v759 = vadd.f32 %v758, %v749
        %v760 = vadd.f32 %v759, %v750
        %v761 = vadd.f32 %v760, %v751
        %v762 = vsel %vm518, %v752, 0.0
        %v763 = vadd.f32 %v761, %v762
        %v764 = vrot.slane %v763, 4
        %v765 = vadd.f32 %v763, %v764
        %v766 = vrot.slane %v765, 2
        %v767 = vadd.f32 %v765, %v766
        %v768 = vrot.slane %v767, 1
        %v769 = vadd.f32 %v767, %v768
        %v770 = vld [vmem:[%s471] sm:$0x1]
        %v771 = vmul.f32 %v741, %v511
        %v772 = vsel %vm518, %v771, 0.0
        %773 = vadd.xlane.f32.xlu0 %v772
        %v774 = vpop.xlane.xlu0 %773
        %v775 = vadd.f32 %v770, %v774
        %vm776 = vcmask 0
        %777 = vst.msk [vmem:[%s471] sm:$0x1] %vm776, %v775
        %v778 = vld [vmem:[%s478] sm:$0x1]
        %v779 = vmul.f32 %v769, %v511
        %v780 = vsel %vm518, %v779, 0.0
        %781 = vadd.xlane.f32.xlu0 %v780
        %v782 = vpop.xlane.xlu0 %781
        %v783 = vadd.f32 %v778, %v782
        %784 = vst.msk [vmem:[%s478] sm:$0x1] %vm776, %v783
        %p785 = scmp.lt.s32.totalorder %s21, 1
        %s786 = scalar_select %p785, %s21, 1
        %p787 = scmp.lt.s32.totalorder %s22, 1
        %s788 = scalar_select %p787, %s22, 1
        %s789 = smul.addr %s786, 2
        %s790 = sadd.s32 %s788, %s789
        %s791 = scalar_lea.vmem %s3, %s790
        %p792 = scmp.lt.s32.totalorder %s21, 1
        %s793 = scalar_select %p792, %s21, 1
        %p794 = scmp.lt.s32.totalorder %s22, 1
        %s795 = scalar_select %p794, %s22, 1
        %s796 = smul.addr %s793, 2
        %s797 = sadd.s32 %s795, %s796
        %s798 = scalar_lea.vmem %s4, %s797
        // Predicated region
        $region113: #{ddn_with_residual_loss.1} parent=99 // pred_check
          %p799 = pneg %p151
        $region114: #{ddn_with_residual_loss.1} parent=99 // pred_check_branch
          %801 = sbr.rel (%p799) target = $region116
        $region115: #{ddn_with_residual_loss.1} parent=99 // pred_region
          _
        $region116: #{ddn_with_residual_loss.1} parent=99 // pred_fallthru
          _
        // Predicated region
        $region117: #{ddn_with_residual_loss.1} parent=99 // pred_check
          %p802 = pneg %p179
        $region118: #{ddn_with_residual_loss.1} parent=99 // pred_check_branch
          %804 = sbr.rel (%p802) target = $region120
        $region119: #{ddn_with_residual_loss.1} parent=99 // pred_region
          _
        $region120: #{ddn_with_residual_loss.1} parent=99 // pred_fallthru
          _
      $region100: #{ddn_with_residual_loss.1} parent=5 // pred_fallthru
        _
      %p805 = scmp.le.s32.totalorder 2, %s11
      // Predicated region
      $region121: #{ddn_with_residual_loss.1} parent=5 // pred_check
        %p806 = pneg %p805
      $region122: #{ddn_with_residual_loss.1} parent=5 // pred_check_branch
        %808 = sbr.rel (%p806) target = $region124
      $region123: #{ddn_with_residual_loss.1} parent=5 // pred_region
        %s809 = ssub.s32 %s11, 2
        // Predicated region
        $region125: #{ddn_with_residual_loss.1} parent=123 // pred_check
          %p810 = pneg %p157
        $region126: #{ddn_with_residual_loss.1} parent=123 // pred_check_branch
          %812 = sbr.rel (%p810) target = $region128
        $region127: #{ddn_with_residual_loss.1} parent=123 // pred_region
          %p813 = scmp.lt.s32.totalorder %s24, 1
          %s814 = scalar_select %p813, %s24, 1
          %p815 = scmp.lt.s32.totalorder %s25, 1
          %s816 = scalar_select %p815, %s25, 1
          %s817 = smul.addr %s814, 2
          %s818 = sadd.s32 %s816, %s817
          %s819 = scalar_lea.vmem %s3, %s818
        $region128: #{ddn_with_residual_loss.1} parent=123 // pred_fallthru
          _
        // Predicated region
        $region129: #{ddn_with_residual_loss.1} parent=123 // pred_check
          %p820 = pneg %p185
        $region130: #{ddn_with_residual_loss.1} parent=123 // pred_check_branch
          %822 = sbr.rel (%p820) target = $region132
        $region131: #{ddn_with_residual_loss.1} parent=123 // pred_region
          %p823 = scmp.lt.s32.totalorder %s24, 1
          %s824 = scalar_select %p823, %s24, 1
          %p825 = scmp.lt.s32.totalorder %s25, 1
          %s826 = scalar_select %p825, %s25, 1
          %s827 = smul.addr %s824, 2
          %s828 = sadd.s32 %s826, %s827
          %s829 = scalar_lea.vmem %s4, %s828
        $region132: #{ddn_with_residual_loss.1} parent=123 // pred_fallthru
          _
      $region124: #{ddn_with_residual_loss.1} parent=5 // pred_fallthru
        _
    $region6: #{ddn_with_residual_loss.1} parent=1 // loop_footer
      %s15 = sadd.s32 1, %s11
    $region7: #{ddn_with_residual_loss.1} parent=1 // loop_footer_branch
      %10 = sbr.rel target = $region3
    $region8: #{ddn_with_residual_loss.1} parent=1 // loop_exit
      _

</llo_original>
